<compile_context>
chip_gen: v7x
topology: tpu7x:2x2x1
jax: 0.10.0
libtpu: 0.0.40
codegen_flags: <defaults>
</compile_context>

<pallas_src>
import jax
import jax.numpy as jnp
from jax.experimental import pallas as pl
from jax.experimental.pallas import tpu as pltpu

NEG_SLOPE = 0.01   # nn.LeakyReLU default negative_slope
LANE = 128
NEG_INF = -1e30    # bias for padded head columns -> softmax weight exactly 0 in f32


def _leaky_relu(x):
    return jnp.where(x >= 0, x, NEG_SLOPE * x)


def mlp_kernel(x_ref, w1_ref, b1_ref, w2_ref, b2_ref, w3_ref, b3_ref, o_ref):
    x = x_ref[...]

    # fc1 + dropout(p=0, identity) + LeakyReLU (bias-add / activation in f32)
    # TODO(synk): nn.Dropout(drop_rate=0.0) is an identity; no masking needed.
    h = jnp.dot(x, w1_ref[...], preferred_element_type=jnp.float32) + b1_ref[...]
    h = _leaky_relu(h)

    # fc2 + LeakyReLU (cast back to matmul dtype so bf16 path hits bf16 MXU)
    h = h.astype(w2_ref.dtype)
    h = jnp.dot(h, w2_ref[...], preferred_element_type=jnp.float32) + b2_ref[...]
    h = _leaky_relu(h)

    # head: lane-padded to 128 output columns; padded columns carry bias -1e30
    h = h.astype(w3_ref.dtype)
    logits = jnp.dot(h, w3_ref[...], preferred_element_type=jnp.float32) + b3_ref[...]

    # softmax over last dim, numerically stable; exact reciprocal so rows sum to 1
    m = jnp.max(logits, axis=-1, keepdims=True)
    e = jnp.exp(logits - m)
    denom = jnp.sum(e, axis=-1, keepdims=True)
    o_ref[...] = (e / denom).astype(o_ref.dtype)


def mymodel_forward(x, params, *, use_bf16=False, block_rows=512):
    """x: (B, in_channel) f32. params: dict of pre-transposed weights/biases."""
    w1, b1 = params["w1"], params["b1"]
    w2, b2 = params["w2"], params["b2"]
    w3, b3 = params["w3"], params["b3"]

    B, in_ch = x.shape
    hidden = w1.shape[1]
    out_dim = w3.shape[1]

    # --- Lane-dense head padding: out_dim -> multiple of 128 -------------------
    out_pad = max(LANE, ((out_dim + LANE - 1) // LANE) * LANE)
    w3_p = jnp.zeros((hidden, out_pad), w3.dtype).at[:, :out_dim].set(w3)
    b3_p = jnp.full((1, out_pad), NEG_INF, jnp.float32).at[:, :out_dim].set(
        b3.astype(jnp.float32)
    )

    # --- Batch tiling: weights stay VMEM-resident across the parallel grid -----
    tb = block_rows
    if B <= tb:
        tb = max(8, ((B + 7) // 8) * 8)       # single tile, sublane-aligned
    b_padded = ((B + tb - 1) // tb) * tb
    if b_padded != B:
        x = jnp.pad(x, ((0, b_padded - B), (0, 0)))

    mm_dtype = jnp.bfloat16 if use_bf16 else jnp.float32
    x_in = x.astype(mm_dtype)
    w1_in = w1.astype(mm_dtype)
    w2_in = w2.astype(mm_dtype)
    w3_in = w3_p.astype(mm_dtype)
    b1_in = b1.astype(jnp.float32)
    b2_in = b2.astype(jnp.float32)

    def resident(a):  # weight/bias block: full array, same block every grid step
        return pl.BlockSpec(a.shape, lambda i, nd=a.ndim: (0,) * nd)

    out = pl.pallas_call(
        mlp_kernel,
        out_shape=jax.ShapeDtypeStruct((b_padded, out_pad), jnp.float32),
        grid=(b_padded // tb,),
        in_specs=[
            pl.BlockSpec((tb, in_ch), lambda i: (i, 0)),
            resident(w1_in), resident(b1_in),
            resident(w2_in), resident(b2_in),
            resident(w3_in), resident(b3_p),
        ],
        out_specs=pl.BlockSpec((tb, out_pad), lambda i: (i, 0)),
        compiler_params=pltpu.CompilerParams(
            dimension_semantics=("parallel",),
        ),
    )(x_in, w1_in, b1_in, w2_in, b2_in, w3_in, b3_p)

    return out[:B, :out_dim]


def init_params(key, in_channel, output_channel):
    hidden = in_channel * 4
    k1, k2, k3, k4, k5, k6 = jax.random.split(key, 6)

    def linear(kw, kb, fan_in, fan_out):
        # Kaiming-uniform-ish deterministic init (like nn.Linear default bound)
        bound = 1.0 / jnp.sqrt(fan_in)
        w = jax.random.uniform(kw, (fan_in, fan_out), jnp.float32, -bound, bound)
        b = jax.random.uniform(kb, (1, fan_out), jnp.float32, -bound, bound)
        return w, b

    w1, b1 = linear(k1, k2, in_channel, hidden)
    w2, b2 = linear(k3, k4, hidden, hidden)
    w3, b3 = linear(k5, k6, hidden, output_channel)
    return dict(w1=w1, b1=b1, w2=w2, b2=b2, w3=w3, b3=b3)


def reference_forward(x, p):
    h = _leaky_relu(x @ p["w1"] + p["b1"])
    h = _leaky_relu(h @ p["w2"] + p["b2"])
    logits = h @ p["w3"] + p["b3"]
    return jax.nn.softmax(logits, axis=1)


if __name__ == "__main__":
    in_channel = 32
    output_channel = 16
    batch = 8

    key = jax.random.PRNGKey(0)
    kx, kp = jax.random.split(key)
    x = jax.random.normal(kx, (batch, in_channel), jnp.float32)
    params = init_params(kp, in_channel, output_channel)

    # f32 path
    out = jax.block_until_ready(mymodel_forward(x, params))
    ref = reference_forward(x, params)
    assert out.shape == (batch, output_channel)
    assert jnp.allclose(out, ref, atol=1e-4, rtol=1e-4), "mismatch vs. JAX reference"
    assert jnp.allclose(jnp.sum(out, axis=1), jnp.ones((batch,)), atol=1e-4)

    # bf16 matmul path (v6e/v7x variant): check it runs and rows still sum to 1
    out_bf16 = jax.block_until_ready(mymodel_forward(x, params, use_bf16=True))
    assert out_bf16.shape == (batch, output_channel)
    assert jnp.allclose(jnp.sum(out_bf16, axis=1), jnp.ones((batch,)), atol=1e-3)

    print("KERNEL_OK")
</pallas_src>

<mosaic_0001>
module attributes {stable_mosaic.version = 11 : i64} {
  func.func @mlp_kernel(%arg0: i32, %arg1: memref<8x32xf32, #tpu.memory_space<vmem>>, %arg2: memref<32x128xf32, #tpu.memory_space<vmem>>, %arg3: memref<1x128xf32, #tpu.memory_space<vmem>>, %arg4: memref<128x128xf32, #tpu.memory_space<vmem>>, %arg5: memref<1x128xf32, #tpu.memory_space<vmem>>, %arg6: memref<128x128xf32, #tpu.memory_space<vmem>>, %arg7: memref<1x128xf32, #tpu.memory_space<vmem>>, %arg8: memref<8x128xf32, #tpu.memory_space<vmem>>) attributes {dimension_semantics = [#tpu.dimension_semantics<parallel>], iteration_bounds = array<i64: 1>, scalar_prefetch = 0 : i64, scratch_operands = 0 : i64, tpu.core_type = #tpu.core_type<tc>, window_params = [{transform_indices = @transform_0, window_bounds = array<i64: 8, 32>}, {pipeline_mode = #tpu.pipeline_mode<synchronous>, transform_indices = @transform_1, window_bounds = array<i64: 32, 128>}, {pipeline_mode = #tpu.pipeline_mode<synchronous>, transform_indices = @transform_2, window_bounds = array<i64: 1, 128>}, {pipeline_mode = #tpu.pipeline_mode<synchronous>, transform_indices = @transform_3, window_bounds = array<i64: 128, 128>}, {pipeline_mode = #tpu.pipeline_mode<synchronous>, transform_indices = @transform_4, window_bounds = array<i64: 1, 128>}, {pipeline_mode = #tpu.pipeline_mode<synchronous>, transform_indices = @transform_5, window_bounds = array<i64: 128, 128>}, {pipeline_mode = #tpu.pipeline_mode<synchronous>, transform_indices = @transform_6, window_bounds = array<i64: 1, 128>}, {transform_indices = @transform_7, window_bounds = array<i64: 8, 128>}]} {
    %c0 = arith.constant 0 : index
    %c0_0 = arith.constant 0 : index
    %0 = vector.load %arg1[%c0, %c0_0] : memref<8x32xf32, #tpu.memory_space<vmem>>, vector<8x32xf32>
    %c0_1 = arith.constant 0 : index
    %c0_2 = arith.constant 0 : index
    %1 = vector.load %arg2[%c0_1, %c0_2] : memref<32x128xf32, #tpu.memory_space<vmem>>, vector<32x128xf32>
    %cst = arith.constant dense<0.000000e+00> : vector<8x128xf32>
    %2 = tpu.matmul %0, %1, %cst {dimension_numbers = #tpu.dot_dimension_numbers<[1], [0], [0], [1], [0, 0, 1, 1], [], []>} : vector<8x32xf32>, vector<32x128xf32>, vector<8x128xf32> -> vector<8x128xf32>
    %c0_3 = arith.constant 0 : index
    %c0_4 = arith.constant 0 : index
    %3 = vector.load %arg3[%c0_3, %c0_4] : memref<1x128xf32, #tpu.memory_space<vmem>>, vector<1x128xf32>
    %4 = vector.broadcast %3 : vector<1x128xf32> to vector<8x128xf32>
    %5 = arith.addf %2, %4 : vector<8x128xf32>
    %cst_5 = arith.constant 0.000000e+00 : f32
    %6 = vector.broadcast %cst_5 : f32 to vector<8x128xf32>
    %7 = arith.cmpf oge, %5, %6 : vector<8x128xf32>
    %cst_6 = arith.constant 0.00999999977 : f32
    %8 = vector.broadcast %cst_6 : f32 to vector<8x128xf32>
    %9 = arith.mulf %8, %5 : vector<8x128xf32>
    %10 = arith.select %7, %5, %9 : vector<8x128xi1>, vector<8x128xf32>
    %c0_7 = arith.constant 0 : index
    %c0_8 = arith.constant 0 : index
    %11 = vector.load %arg4[%c0_7, %c0_8] : memref<128x128xf32, #tpu.memory_space<vmem>>, vector<128x128xf32>
    %cst_9 = arith.constant dense<0.000000e+00> : vector<8x128xf32>
    %12 = tpu.matmul %10, %11, %cst_9 {dimension_numbers = #tpu.dot_dimension_numbers<[1], [0], [0], [1], [0, 0, 1, 1], [], []>} : vector<8x128xf32>, vector<128x128xf32>, vector<8x128xf32> -> vector<8x128xf32>
    %c0_10 = arith.constant 0 : index
    %c0_11 = arith.constant 0 : index
    %13 = vector.load %arg5[%c0_10, %c0_11] : memref<1x128xf32, #tpu.memory_space<vmem>>, vector<1x128xf32>
    %14 = vector.broadcast %13 : vector<1x128xf32> to vector<8x128xf32>
    %15 = arith.addf %12, %14 : vector<8x128xf32>
    %cst_12 = arith.constant 0.000000e+00 : f32
    %16 = vector.broadcast %cst_12 : f32 to vector<8x128xf32>
    %17 = arith.cmpf oge, %15, %16 : vector<8x128xf32>
    %cst_13 = arith.constant 0.00999999977 : f32
    %18 = vector.broadcast %cst_13 : f32 to vector<8x128xf32>
    %19 = arith.mulf %18, %15 : vector<8x128xf32>
    %20 = arith.select %17, %15, %19 : vector<8x128xi1>, vector<8x128xf32>
    %c0_14 = arith.constant 0 : index
    %c0_15 = arith.constant 0 : index
    %21 = vector.load %arg6[%c0_14, %c0_15] : memref<128x128xf32, #tpu.memory_space<vmem>>, vector<128x128xf32>
    %cst_16 = arith.constant dense<0.000000e+00> : vector<8x128xf32>
    %22 = tpu.matmul %20, %21, %cst_16 {dimension_numbers = #tpu.dot_dimension_numbers<[1], [0], [0], [1], [0, 0, 1, 1], [], []>} : vector<8x128xf32>, vector<128x128xf32>, vector<8x128xf32> -> vector<8x128xf32>
    %c0_17 = arith.constant 0 : index
    %c0_18 = arith.constant 0 : index
    %23 = vector.load %arg7[%c0_17, %c0_18] : memref<1x128xf32, #tpu.memory_space<vmem>>, vector<1x128xf32>
    %24 = vector.broadcast %23 : vector<1x128xf32> to vector<8x128xf32>
    %25 = arith.addf %22, %24 : vector<8x128xf32>
    %cst_19 = arith.constant dense<0xFF800000> : vector<8xf32>
    %26 = vector.multi_reduction <maximumf>, %25, %cst_19 [1] : vector<8x128xf32> to vector<8xf32>
    %27 = vector.shape_cast %26 : vector<8xf32> to vector<8x1xf32>
    %28 = vector.broadcast %27 : vector<8x1xf32> to vector<8x128xf32>
    %29 = arith.subf %25, %28 : vector<8x128xf32>
    %30 = math.exp %29 : vector<8x128xf32>
    %cst_20 = arith.constant dense<0.000000e+00> : vector<8xf32>
    %31 = vector.multi_reduction <add>, %30, %cst_20 [1] : vector<8x128xf32> to vector<8xf32>
    %32 = vector.shape_cast %31 : vector<8xf32> to vector<8x1xf32>
    %33 = vector.broadcast %32 : vector<8x1xf32> to vector<8x128xf32>
    %34 = arith.divf %30, %33 : vector<8x128xf32>
    %c0_21 = arith.constant 0 : index
    %c0_22 = arith.constant 0 : index
    %35 = vector.load %arg8[%c0_21, %c0_22] : memref<8x128xf32, #tpu.memory_space<vmem>>, vector<8x128xf32>
    tpu.vector_store %arg8[%c0_21, %c0_22], %34 {strides = array<i32>} : memref<8x128xf32, #tpu.memory_space<vmem>>, vector<8x128xf32>,
    return
  }
  func.func @transform_0(%arg0: i32) -> (i32, i32) {
    %c0_i32 = arith.constant 0 : i32
    %c0_i32_0 = arith.constant 0 : i32
    return %arg0, %c0_i32 : i32, i32
  }
  func.func @transform_1(%arg0: i32) -> (i32, i32) {
    %c0_i32 = arith.constant 0 : i32
    %c0_i32_0 = arith.constant 0 : i32
    %c0_i32_1 = arith.constant 0 : i32
    return %c0_i32, %c0_i32_0 : i32, i32
  }
  func.func @transform_2(%arg0: i32) -> (i32, i32) {
    %c0_i32 = arith.constant 0 : i32
    %c0_i32_0 = arith.constant 0 : i32
    %c0_i32_1 = arith.constant 0 : i32
    return %c0_i32, %c0_i32_0 : i32, i32
  }
  func.func @transform_3(%arg0: i32) -> (i32, i32) {
    %c0_i32 = arith.constant 0 : i32
    %c0_i32_0 = arith.constant 0 : i32
    %c0_i32_1 = arith.constant 0 : i32
    return %c0_i32, %c0_i32_0 : i32, i32
  }
  func.func @transform_4(%arg0: i32) -> (i32, i32) {
    %c0_i32 = arith.constant 0 : i32
    %c0_i32_0 = arith.constant 0 : i32
    %c0_i32_1 = arith.constant 0 : i32
    return %c0_i32, %c0_i32_0 : i32, i32
  }
  func.func @transform_5(%arg0: i32) -> (i32, i32) {
    %c0_i32 = arith.constant 0 : i32
    %c0_i32_0 = arith.constant 0 : i32
    %c0_i32_1 = arith.constant 0 : i32
    return %c0_i32, %c0_i32_0 : i32, i32
  }
  func.func @transform_6(%arg0: i32) -> (i32, i32) {
    %c0_i32 = arith.constant 0 : i32
    %c0_i32_0 = arith.constant 0 : i32
    %c0_i32_1 = arith.constant 0 : i32
    return %c0_i32, %c0_i32_0 : i32, i32
  }
  func.func @transform_7(%arg0: i32) -> (i32, i32) {
    %c0_i32 = arith.constant 0 : i32
    %c0_i32_0 = arith.constant 0 : i32
    return %arg0, %c0_i32 : i32, i32
  }
}

</mosaic_0001>

<llo_original>
// kernel: tpu_custom_call.1
$region0: #{tpu_custom_call.1}
  #allocation0 [shape = 'u32[]', space=smem, size = 0x4, offset = 0x4, fixed_abs, tag = 'smem constant byte address 0x4 - core index']
  #allocation1 [shape = 'u32[144,128]{1,0:T(1,128)}', space=vmem, size = 0x12000, scoped, tag = 'internal scratch']
  %s0 = inlined_call_operand.hbm [shape: f32[8,32], index: 0, kind: input, shape index: {}]
  %s1 = inlined_call_operand.hbm [shape: f32[32,128], index: 1, kind: input, shape index: {}]
  %s2 = inlined_call_operand.vmem [shape: f32[1,128], index: 2, kind: input, shape index: {}]
  %s3 = inlined_call_operand.hbm [shape: f32[128,128], index: 3, kind: input, shape index: {}]
  %s4 = inlined_call_operand.vmem [shape: f32[1,128], index: 4, kind: input, shape index: {}]
  %s5 = inlined_call_operand.hbm [shape: f32[128,128], index: 5, kind: input, shape index: {}]
  %s6 = inlined_call_operand.vmem [shape: f32[1,128], index: 6, kind: input, shape index: {}]
  %s7 = inlined_call_operand.hbm [shape: f32[8,128], index: 7, kind: output, shape index: {}]
  %s8 = sld [smem:[#allocation0]]
  $region54: #{tpu_custom_call.1} parent=0
    _
  %s10 = ssub.s32 1, %s8
  %s11 = scalar_select 0, %s10, %s8
  $region1: #{tpu_custom_call.1} parent=0
    #allocation2 [shape = 'u8[4096]{0}', space=vmem, size = 0x1000, scoped, tag = 'input window, operand 0, single buffered']
    #allocation3 [shape = 's32[1]{0}', space=sflag, size = 0x4, scoped, tag = 'scoped memory for tpu_custom_call.1']
    #allocation4 [shape = 's32[1]{0}', space=sflag, size = 0x4, scoped, tag = 'scoped memory for tpu_custom_call.1']
    #allocation5 [shape = 'u8[16384]{0}', space=vmem, size = 0x4000, scoped, tag = 'input window, operand 1, single buffered']
    #allocation6 [shape = 's32[1]{0}', space=sflag, size = 0x4, scoped, tag = 'scoped memory for tpu_custom_call.1']
    #allocation7 [shape = 'u8[65536]{0}', space=vmem, size = 0x10000, scoped, tag = 'input window, operand 3, single buffered']
    #allocation8 [shape = 'u8[65536]{0}', space=vmem, size = 0x10000, scoped, tag = 'input window, operand 5, single buffered']
    #allocation9 [shape = 's32[1]{0}', space=sflag, size = 0x4, scoped, tag = 'scoped memory for tpu_custom_call.1']
    #allocation10 [shape = 'u8[4096]{0}', space=vmem, size = 0x1000, scoped, tag = 'output window, operand 0, single buffered']
    %12 = vsyncpa [#allocation3], 0
    %13 = vsyncpa [#allocation6], 0
    %14 = vsyncpa [#allocation9], 0
    %15 = vsyncpa [#allocation4], 0
    // Predicated region
    $region2: #{tpu_custom_call.1} parent=1 // pred_check
      _
    $region3: #{tpu_custom_call.1} parent=1 // pred_check_branch
      %17 = sbr.rel (0) target = $region5
    $region4: #{tpu_custom_call.1} parent=1 // pred_region
      %s19 = ssub.s32 128, 128
      %20 = vsyncadd [#allocation3], %s19
      %s22 = sshll.u32 [#allocation2], 4
      %s23 = int_to_ptr.vmem [resolvable:$true] %s22
      %25 = dma.hbm_to_vmem [thread:$0]  %s0, 128, %s23, [#allocation3]
    $region5: #{tpu_custom_call.1} parent=1 // pred_fallthru
      _
    // Predicated region
    $region6: #{tpu_custom_call.1} parent=1 // pred_check
      _
    $region7: #{tpu_custom_call.1} parent=1 // pred_check_branch
      %27 = sbr.rel (0) target = $region9
    $region8: #{tpu_custom_call.1} parent=1 // pred_region
      %s29 = ssub.s32 512, 512
      %30 = vsyncadd [#allocation6], %s29
      %s31 = sshll.u32 [#allocation5], 4
      %s32 = int_to_ptr.vmem [resolvable:$true] %s31
      %37 = dma.hbm_to_vmem [thread:$0]  %s1, 512, %s32, [#allocation6], 128, 128, 8
    $region9: #{tpu_custom_call.1} parent=1 // pred_fallthru
      _
    // Predicated region
    $region10: #{tpu_custom_call.1} parent=1 // pred_check
      _
    $region11: #{tpu_custom_call.1} parent=1 // pred_check_branch
      %39 = sbr.rel (0) target = $region13
    $region12: #{tpu_custom_call.1} parent=1 // pred_region
      _
    $region13: #{tpu_custom_call.1} parent=1 // pred_fallthru
      _
    // Predicated region
    $region14: #{tpu_custom_call.1} parent=1 // pred_check
      _
    $region15: #{tpu_custom_call.1} parent=1 // pred_check_branch
      %41 = sbr.rel (0) target = $region17
    $region16: #{tpu_custom_call.1} parent=1 // pred_region
      %s43 = ssub.s32 2048, 2048
      %44 = vsyncadd [#allocation6], %s43
      %s45 = sshll.u32 [#allocation7], 4
      %s46 = int_to_ptr.vmem [resolvable:$true] %s45
      %51 = dma.hbm_to_vmem [thread:$0]  %s3, 2048, %s46, [#allocation6], 128, 128, 8
    $region17: #{tpu_custom_call.1} parent=1 // pred_fallthru
      _
    // Predicated region
    $region18: #{tpu_custom_call.1} parent=1 // pred_check
      _
    $region19: #{tpu_custom_call.1} parent=1 // pred_check_branch
      %53 = sbr.rel (0) target = $region21
    $region20: #{tpu_custom_call.1} parent=1 // pred_region
      _
    $region21: #{tpu_custom_call.1} parent=1 // pred_fallthru
      _
    // Predicated region
    $region22: #{tpu_custom_call.1} parent=1 // pred_check
      _
    $region23: #{tpu_custom_call.1} parent=1 // pred_check_branch
      %55 = sbr.rel (0) target = $region25
    $region24: #{tpu_custom_call.1} parent=1 // pred_region
      %s57 = ssub.s32 2048, 2048
      %58 = vsyncadd [#allocation9], %s57
      %s59 = sshll.u32 [#allocation8], 4
      %s60 = int_to_ptr.vmem [resolvable:$true] %s59
      %65 = dma.hbm_to_vmem [thread:$0]  %s5, 2048, %s60, [#allocation9], 128, 128, 8
    $region25: #{tpu_custom_call.1} parent=1 // pred_fallthru
      _
    // Predicated region
    $region26: #{tpu_custom_call.1} parent=1 // pred_check
      _
    $region27: #{tpu_custom_call.1} parent=1 // pred_check_branch
      %67 = sbr.rel (0) target = $region29
    $region28: #{tpu_custom_call.1} parent=1 // pred_region
      _
    $region29: #{tpu_custom_call.1} parent=1 // pred_fallthru
      _
    // Predicated region
    $region30: #{tpu_custom_call.1} parent=1 // pred_check
      _
    $region31: #{tpu_custom_call.1} parent=1 // pred_check_branch
      %69 = sbr.rel (0) target = $region33
    $region32: #{tpu_custom_call.1} parent=1 // pred_region
      %70 = dma.done [#allocation3], 128
    $region33: #{tpu_custom_call.1} parent=1 // pred_fallthru
      _
    // Predicated region
    $region34: #{tpu_custom_call.1} parent=1 // pred_check
      _
    $region35: #{tpu_custom_call.1} parent=1 // pred_check_branch
      %72 = sbr.rel (0) target = $region37
    $region36: #{tpu_custom_call.1} parent=1 // pred_region
      %73 = dma.done [#allocation6], 512
    $region37: #{tpu_custom_call.1} parent=1 // pred_fallthru
      _
    // Predicated region
    $region38: #{tpu_custom_call.1} parent=1 // pred_check
      _
    $region39: #{tpu_custom_call.1} parent=1 // pred_check_branch
      %75 = sbr.rel (0) target = $region41
    $region40: #{tpu_custom_call.1} parent=1 // pred_region
      %76 = dma.done [#allocation6], 2048
    $region41: #{tpu_custom_call.1} parent=1 // pred_fallthru
      _
    // Predicated region
    $region42: #{tpu_custom_call.1} parent=1 // pred_check
      _
    $region43: #{tpu_custom_call.1} parent=1 // pred_check_branch
      %78 = sbr.rel (0) target = $region45
    $region44: #{tpu_custom_call.1} parent=1 // pred_region
      %79 = dma.done [#allocation9], 2048
    $region45: #{tpu_custom_call.1} parent=1 // pred_fallthru
      _
    %v80 = vld [vmem:[#allocation2] sm:$0xff]
    %v81 = vld [vmem:[#allocation5] sm:$0xff]
    %v82 = vld [vmem:[#allocation5 + $0x8] sm:$0xff]
    %v83 = vld [vmem:[#allocation5 + $0x10] sm:$0xff]
    %v84 = vld [vmem:[#allocation5 + $0x18] sm:$0xff]
    %v85 = vld [vmem:[%s2] sm:$0x1]
    %v87 = vlaneseq
    %v88 = vshrl.u32 %v87, 7
    %v89 = vsub.s32 0, %v88
    %v90 = vrot.slane %v85, %v89
    %vm92 = vcmask 261120
    %v94 = vsel %vm92, %v80, 0
    %96 = vmatprep.subr.mxu0 0.0
    %97 = vmatpush1.msra.mxu0 %v81
    %98 = vmatprep.subr.mxu0 0.0
    %99 = vmatpush1.msra.mxu0 %v82
    %100 = vmatprep.subr.mxu0 0.0
    %101 = vmatpush1.msra.mxu0 %v83
    %102 = vmatprep.subr.mxu0 0.0
    %103 = vmatpush1.msra.mxu0 %v84
    %104 = vmatprep.subr.mxu0 0.0
    %105 = vmatpush1.msra.mxu0 0.0
    %106 = vmatprep.subr.mxu0 0.0
    %107 = vmatpush1.msra.mxu0 0.0
    %108 = vmatprep.subr.mxu0 0.0
    %109 = vmatpush1.msra.mxu0 0.0
    %110 = vmatprep.subr.mxu0 0.0
    %111 = vmatpush1.msra.mxu0 0.0
    %112 = vmatprep.subr.mxu0 0.0
    %113 = vmatpush1.msra.mxu0 0.0
    %114 = vmatprep.subr.mxu0 0.0
    %115 = vmatpush1.msra.mxu0 0.0
    %116 = vmatprep.subr.mxu0 0.0
    %117 = vmatpush1.msra.mxu0 0.0
    %118 = vmatprep.subr.mxu0 0.0
    %119 = vmatpush1.msra.mxu0 0.0
    %120 = vmatprep.subr.mxu0 0.0
    %121 = vmatpush1.msra.mxu0 0.0
    %122 = vmatprep.subr.mxu0 0.0
    %123 = vmatpush1.msra.mxu0 0.0
    %124 = vmatprep.subr.mxu0 0.0
    %125 = vmatpush1.msra.mxu0 0.0
    %126 = vmatprep.subr.mxu0 0.0
    %127 = vmatpush1.msra.mxu0 0.0
    %128 = vmatprep.subr.mxu0 0.0
    %129 = vmatpush1.msra.mxu0 0.0
    %130 = vmatprep.subr.mxu0 0.0
    %131 = vmatpush1.msra.mxu0 0.0
    %132 = vmatprep.subr.mxu0 0.0
    %133 = vmatpush1.msra.mxu0 0.0
    %134 = vmatprep.subr.mxu0 0.0
    %135 = vmatpush1.msra.mxu0 0.0
    %136 = vmatprep.subr.mxu0 0.0
    %137 = vmatpush1.msra.mxu0 0.0
    %138 = vmatprep.subr.mxu0 0.0
    %139 = vmatpush1.msra.mxu0 0.0
    %140 = vmatprep.subr.mxu0 0.0
    %141 = vmatpush1.msra.mxu0 0.0
    %142 = vmatprep.subr.mxu0 0.0
    %143 = vmatpush1.msra.mxu0 0.0
    %144 = vmatprep.subr.mxu0 0.0
    %145 = vmatpush1.msra.mxu0 0.0
    %146 = vmatprep.subr.mxu0 0.0
    %147 = vmatpush1.msra.mxu0 0.0
    %148 = vmatprep.subr.mxu0 0.0
    %149 = vmatpush1.msra.mxu0 0.0
    %150 = vmatprep.subr.mxu0 0.0
    %151 = vmatpush1.msra.mxu0 0.0
    %152 = vmatprep.subr.mxu0 0.0
    %153 = vmatpush1.msra.mxu0 0.0
    %154 = vmatprep.subr.mxu0 0.0
    %155 = vmatpush1.msra.mxu0 0.0
    %156 = vmatprep.subr.mxu0 0.0
    %157 = vmatpush1.msra.mxu0 0.0
    %158 = vmatprep.subr.mxu0 0.0
    %159 = vmatpush1.msra.mxu0 0.0
    %160 = vmatprep.mubr.f32.mxu0 0.0
    %161 = vmatmul.mubr.f32.gmra.mrb[0].mxu0 %v94
    %v162 = vpop.f32.mrb[0].mxu0
    %v163 = vadd.f32 %v90, %v162
    %v164 = vpop.f32.mrb[0].mxu0
    %165 = vdwg.mxu0
    %vm166 = vcmp.ge.f32.partialorder %v163, 0.0
    %v167 = vmul.f32 %v163, 0.01
    %v168 = vsel %vm166, %v163, %v167
    %v169 = vld [vmem:[#allocation7] sm:$0xff]
    %v170 = vld [vmem:[#allocation7 + $0x8] sm:$0xff]
    %v171 = vld [vmem:[#allocation7 + $0x10] sm:$0xff]
    %v172 = vld [vmem:[#allocation7 + $0x18] sm:$0xff]
    %v173 = vld [vmem:[#allocation7 + $0x20] sm:$0xff]
    %v174 = vld [vmem:[#allocation7 + $0x28] sm:$0xff]
    %v175 = vld [vmem:[#allocation7 + $0x30] sm:$0xff]
    %v176 = vld [vmem:[#allocation7 + $0x38] sm:$0xff]
    %v177 = vld [vmem:[#allocation7 + $0x40] sm:$0xff]
    %v178 = vld [vmem:[#allocation7 + $0x48] sm:$0xff]
    %v179 = vld [vmem:[#allocation7 + $0x50] sm:$0xff]
    %v180 = vld [vmem:[#allocation7 + $0x58] sm:$0xff]
    %v181 = vld [vmem:[#allocation7 + $0x60] sm:$0xff]
    %v182 = vld [vmem:[#allocation7 + $0x68] sm:$0xff]
    %v183 = vld [vmem:[#allocation7 + $0x70] sm:$0xff]
    %v184 = vld [vmem:[#allocation7 + $0x78] sm:$0xff]
    %v185 = vld [vmem:[%s4] sm:$0x1]
    %v187 = vlaneseq
    %v188 = vshrl.u32 %v187, 7
    %v189 = vsub.s32 0, %v188
    %v190 = vrot.slane %v185, %v189
    %192 = vmatprep.subr.mxu0 0.0
    %193 = vmatpush1.msra.mxu0 %v169
    %194 = vmatprep.subr.mxu0 0.0
    %195 = vmatpush1.msra.mxu0 %v170
    %196 = vmatprep.subr.mxu0 0.0
    %197 = vmatpush1.msra.mxu0 %v171
    %198 = vmatprep.subr.mxu0 0.0
    %199 = vmatpush1.msra.mxu0 %v172
    %200 = vmatprep.subr.mxu0 0.0
    %201 = vmatpush1.msra.mxu0 %v173
    %202 = vmatprep.subr.mxu0 0.0
    %203 = vmatpush1.msra.mxu0 %v174
    %204 = vmatprep.subr.mxu0 0.0
    %205 = vmatpush1.msra.mxu0 %v175
    %206 = vmatprep.subr.mxu0 0.0
    %207 = vmatpush1.msra.mxu0 %v176
    %208 = vmatprep.subr.mxu0 0.0
    %209 = vmatpush1.msra.mxu0 %v177
    %210 = vmatprep.subr.mxu0 0.0
    %211 = vmatpush1.msra.mxu0 %v178
    %212 = vmatprep.subr.mxu0 0.0
    %213 = vmatpush1.msra.mxu0 %v179
    %214 = vmatprep.subr.mxu0 0.0
    %215 = vmatpush1.msra.mxu0 %v180
    %216 = vmatprep.subr.mxu0 0.0
    %217 = vmatpush1.msra.mxu0 %v181
    %218 = vmatprep.subr.mxu0 0.0
    %219 = vmatpush1.msra.mxu0 %v182
    %220 = vmatprep.subr.mxu0 0.0
    %221 = vmatpush1.msra.mxu0 %v183
    %222 = vmatprep.subr.mxu0 0.0
    %223 = vmatpush1.msra.mxu0 %v184
    %224 = vmatprep.subr.mxu0 0.0
    %225 = vmatpush1.msra.mxu0 0.0
    %226 = vmatprep.subr.mxu0 0.0
    %227 = vmatpush1.msra.mxu0 0.0
    %228 = vmatprep.subr.mxu0 0.0
    %229 = vmatpush1.msra.mxu0 0.0
    %230 = vmatprep.subr.mxu0 0.0
    %231 = vmatpush1.msra.mxu0 0.0
    %232 = vmatprep.subr.mxu0 0.0
    %233 = vmatpush1.msra.mxu0 0.0
    %234 = vmatprep.subr.mxu0 0.0
    %235 = vmatpush1.msra.mxu0 0.0
    %236 = vmatprep.subr.mxu0 0.0
    %237 = vmatpush1.msra.mxu0 0.0
    %238 = vmatprep.subr.mxu0 0.0
    %239 = vmatpush1.msra.mxu0 0.0
    %240 = vmatprep.subr.mxu0 0.0
    %241 = vmatpush1.msra.mxu0 0.0
    %242 = vmatprep.subr.mxu0 0.0
    %243 = vmatpush1.msra.mxu0 0.0
    %244 = vmatprep.subr.mxu0 0.0
    %245 = vmatpush1.msra.mxu0 0.0
    %246 = vmatprep.subr.mxu0 0.0
    %247 = vmatpush1.msra.mxu0 0.0
    %248 = vmatprep.subr.mxu0 0.0
    %249 = vmatpush1.msra.mxu0 0.0
    %250 = vmatprep.subr.mxu0 0.0
    %251 = vmatpush1.msra.mxu0 0.0
    %252 = vmatprep.subr.mxu0 0.0
    %253 = vmatpush1.msra.mxu0 0.0
    %254 = vmatprep.subr.mxu0 0.0
    %255 = vmatpush1.msra.mxu0 0.0
    %256 = vmatprep.mubr.f32.mxu0 0.0
    %257 = vmatmul.mubr.f32.gmra.mrb[0].mxu0 %v168
    %v258 = vpop.f32.mrb[0].mxu0
    %v259 = vadd.f32 %v190, %v258
    %v260 = vpop.f32.mrb[0].mxu0
    %261 = vdwg.mxu0
    %vm262 = vcmp.ge.f32.partialorder %v259, 0.0
    %v263 = vmul.f32 %v259, 0.01
    %v264 = vsel %vm262, %v259, %v263
    %v265 = vld [vmem:[#allocation8] sm:$0xff]
    %v266 = vld [vmem:[#allocation8 + $0x8] sm:$0xff]
    %v267 = vld [vmem:[#allocation8 + $0x10] sm:$0xff]
    %v268 = vld [vmem:[#allocation8 + $0x18] sm:$0xff]
    %v269 = vld [vmem:[#allocation8 + $0x20] sm:$0xff]
    %v270 = vld [vmem:[#allocation8 + $0x28] sm:$0xff]
    %v271 = vld [vmem:[#allocation8 + $0x30] sm:$0xff]
    %v272 = vld [vmem:[#allocation8 + $0x38] sm:$0xff]
    %v273 = vld [vmem:[#allocation8 + $0x40] sm:$0xff]
    %v274 = vld [vmem:[#allocation8 + $0x48] sm:$0xff]
    %v275 = vld [vmem:[#allocation8 + $0x50] sm:$0xff]
    %v276 = vld [vmem:[#allocation8 + $0x58] sm:$0xff]
    %v277 = vld [vmem:[#allocation8 + $0x60] sm:$0xff]
    %v278 = vld [vmem:[#allocation8 + $0x68] sm:$0xff]
    %v279 = vld [vmem:[#allocation8 + $0x70] sm:$0xff]
    %v280 = vld [vmem:[#allocation8 + $0x78] sm:$0xff]
    %v281 = vld [vmem:[%s6] sm:$0x1]
    %v283 = vlaneseq
    %v284 = vshrl.u32 %v283, 7
    %v285 = vsub.s32 0, %v284
    %v286 = vrot.slane %v281, %v285
    %288 = vmatprep.subr.mxu0 0.0
    %289 = vmatpush1.msra.mxu0 %v265
    %290 = vmatprep.subr.mxu0 0.0
    %291 = vmatpush1.msra.mxu0 %v266
    %292 = vmatprep.subr.mxu0 0.0
    %293 = vmatpush1.msra.mxu0 %v267
    %294 = vmatprep.subr.mxu0 0.0
    %295 = vmatpush1.msra.mxu0 %v268
    %296 = vmatprep.subr.mxu0 0.0
    %297 = vmatpush1.msra.mxu0 %v269
    %298 = vmatprep.subr.mxu0 0.0
    %299 = vmatpush1.msra.mxu0 %v270
    %300 = vmatprep.subr.mxu0 0.0
    %301 = vmatpush1.msra.mxu0 %v271
    %302 = vmatprep.subr.mxu0 0.0
    %303 = vmatpush1.msra.mxu0 %v272
    %304 = vmatprep.subr.mxu0 0.0
    %305 = vmatpush1.msra.mxu0 %v273
    %306 = vmatprep.subr.mxu0 0.0
    %307 = vmatpush1.msra.mxu0 %v274
    %308 = vmatprep.subr.mxu0 0.0
    %309 = vmatpush1.msra.mxu0 %v275
    %310 = vmatprep.subr.mxu0 0.0
    %311 = vmatpush1.msra.mxu0 %v276
    %312 = vmatprep.subr.mxu0 0.0
    %313 = vmatpush1.msra.mxu0 %v277
    %314 = vmatprep.subr.mxu0 0.0
    %315 = vmatpush1.msra.mxu0 %v278
    %316 = vmatprep.subr.mxu0 0.0
    %317 = vmatpush1.msra.mxu0 %v279
    %318 = vmatprep.subr.mxu0 0.0
    %319 = vmatpush1.msra.mxu0 %v280
    %320 = vmatprep.subr.mxu0 0.0
    %321 = vmatpush1.msra.mxu0 0.0
    %322 = vmatprep.subr.mxu0 0.0
    %323 = vmatpush1.msra.mxu0 0.0
    %324 = vmatprep.subr.mxu0 0.0
    %325 = vmatpush1.msra.mxu0 0.0
    %326 = vmatprep.subr.mxu0 0.0
    %327 = vmatpush1.msra.mxu0 0.0
    %328 = vmatprep.subr.mxu0 0.0
    %329 = vmatpush1.msra.mxu0 0.0
    %330 = vmatprep.subr.mxu0 0.0
    %331 = vmatpush1.msra.mxu0 0.0
    %332 = vmatprep.subr.mxu0 0.0
    %333 = vmatpush1.msra.mxu0 0.0
    %334 = vmatprep.subr.mxu0 0.0
    %335 = vmatpush1.msra.mxu0 0.0
    %336 = vmatprep.subr.mxu0 0.0
    %337 = vmatpush1.msra.mxu0 0.0
    %338 = vmatprep.subr.mxu0 0.0
    %339 = vmatpush1.msra.mxu0 0.0
    %340 = vmatprep.subr.mxu0 0.0
    %341 = vmatpush1.msra.mxu0 0.0
    %342 = vmatprep.subr.mxu0 0.0
    %343 = vmatpush1.msra.mxu0 0.0
    %344 = vmatprep.subr.mxu0 0.0
    %345 = vmatpush1.msra.mxu0 0.0
    %346 = vmatprep.subr.mxu0 0.0
    %347 = vmatpush1.msra.mxu0 0.0
    %348 = vmatprep.subr.mxu0 0.0
    %349 = vmatpush1.msra.mxu0 0.0
    %350 = vmatprep.subr.mxu0 0.0
    %351 = vmatpush1.msra.mxu0 0.0
    %352 = vmatprep.mubr.f32.mxu0 0.0
    %353 = vmatmul.mubr.f32.gmra.mrb[0].mxu0 %v264
    %v354 = vpop.f32.mrb[0].mxu0
    %v355 = vadd.f32 %v286, %v354
    %v356 = vpop.f32.mrb[0].mxu0
    %357 = vdwg.mxu0
    %358 = vmax.xlane.f32.xlu0 %v355
    %v359 = vpop.xlane.xlu0 %358
    %v360 = vsub.f32 %v355, %v359
    %v361 = vmul.f32 %v360, 1.442695
    %v362 = vpow.pop %v361
    %363 = vadd.xlane.f32.xlu0 %v362
    %v364 = vpop.xlane.xlu0 %363
    %v365 = vrcp.pop %v364
    %v366 = vmul.f32 %v362, %v365
    %367 = vst [vmem:[#allocation10] sm:$0xff] %v366
    // Predicated region
    $region46: #{tpu_custom_call.1} parent=1 // pred_check
      _
    $region47: #{tpu_custom_call.1} parent=1 // pred_check_branch
      %369 = sbr.rel (0) target = $region49
    $region48: #{tpu_custom_call.1} parent=1 // pred_region
      %s371 = ssub.s32 128, 128
      %372 = vsyncadd [#allocation4], %s371
      %s374 = sshll.u32 [#allocation10], 4
      %s375 = int_to_ptr.vmem [resolvable:$true] %s374
      %377 = dma.vmem_to_hbm [thread:$0]  %s375, 128, %s7, [#allocation4]
    $region49: #{tpu_custom_call.1} parent=1 // pred_fallthru
      _
    // Predicated region
    $region50: #{tpu_custom_call.1} parent=1 // pred_check
      _
    $region51: #{tpu_custom_call.1} parent=1 // pred_check_branch
      %379 = sbr.rel (0) target = $region53
    $region52: #{tpu_custom_call.1} parent=1 // pred_region
      %380 = dma.done [#allocation4], 128
    $region53: #{tpu_custom_call.1} parent=1 // pred_fallthru
      _
    %381 = vsyncpa [#allocation3], 1
    %382 = vsyncpa [#allocation6], 1
    %383 = vsyncpa [#allocation9], 1
    %384 = vsyncpa [#allocation4], 1

</llo_original>
